<compile_context>
chip_gen: v5e
topology: v5e:2x2
jax: 0.10.0
libtpu: 0.0.40
codegen_flags: <defaults>
</compile_context>

<pallas_src>
import functools

import jax
import jax.numpy as jnp
from jax import lax
from jax.experimental import pallas as pl
from jax.experimental.pallas import tpu as pltpu


def _round_up(x, m):
    return ((x + m - 1) // m) * m


def _pick_tile(dim, preferred, base):
    """Pick (tile, padded_dim).

    tile is a multiple of `base`.  Exact divisors of the base-rounded dim are
    preferred even when somewhat larger than `preferred` (e.g. 640 for
    dim=1280) so padding is avoided without giving up arithmetic intensity;
    otherwise the padding-minimising tile in [preferred/2, preferred] is used.
    """
    preferred = max(base, (preferred // base) * base)
    max_tile = preferred + preferred // 2        # allow ~1.5x preferred exact fits
    dim_p = _round_up(dim, base)
    if dim_p <= max_tile:
        return dim_p, dim_p                      # single block covers the dim

    best_exact = None
    for t in range(max_tile - max_tile % base, base - 1, -base):
        if dim_p % t == 0:
            best_exact = t
            break

    best_t, best_pad = None, None
    lo = max(base, (preferred // 2 // base) * base)
    for t in range(preferred, lo - 1, -base):
        pad = _round_up(dim, t)
        if best_pad is None or pad < best_pad:
            best_t, best_pad = t, pad

    if best_exact is not None and 2 * best_exact >= best_t:
        return best_exact, dim_p
    return best_t, best_pad


def _gemm_bias_kernel(x_ref, wt_ref, b_ref, o_ref, acc_ref):
    """out = x @ W_eff.T + bias with W_eff precomputed in the wrapper.

    x_ref: (TM, TK), wt_ref: (TK, TN) holding W_eff.T, acc f32 in VMEM.
    """
    k = pl.program_id(2)

    @pl.when(k == 0)
    def _init():
        acc_ref[...] = jnp.zeros_like(acc_ref)

    acc_ref[...] += jnp.dot(x_ref[...], wt_ref[...],
                            preferred_element_type=jnp.float32)

    @pl.when(k == pl.num_programs(2) - 1)
    def _finalize():
        o_ref[...] = (acc_ref[...] + b_ref[...].astype(jnp.float32)
                      ).astype(o_ref.dtype)


def _fused_lora_kernel(x_ref, wt_ref, b_ref, lat_ref, lbt_ref, mlat_ref,
                       mlbt_ref, o_ref, acc_ref, *, rank, scaling_rank):
    """Decode-path kernel: builds the W_eff.T tile in-kernel with VPU FMAs
    (both LoRA terms folded into the weight tile), then ONE MXU dot per step.
    """
    k = pl.program_id(2)

    @pl.when(k == 0)
    def _init():
        acc_ref[...] = jnp.zeros_like(acc_ref)

    # Multiplicative factor (TK, TN): `scaling_rank` broadcast-FMAs.
    # 1/scaling_rank folded into the tiny (TK, SR) factor.
    mlat = mlat_ref[...].astype(jnp.float32) * (1.0 / scaling_rank)  # (TK, SR)
    mlbt = mlbt_ref[...].astype(jnp.float32)                         # (SR, TN)
    mult = mlat[:, 0:1] * mlbt[0:1, :]
    for r in range(1, scaling_rank):
        mult = mult + mlat[:, r:r + 1] * mlbt[r:r + 1, :]

    # Additive LoRA folded into the weight tile with `rank` more FMAs
    # (no thin rank-sized MXU matmul anywhere).
    lat = lat_ref[...].astype(jnp.float32) * (1.0 / rank)            # (TK, R)
    lbt = lbt_ref[...].astype(jnp.float32)                           # (R, TN)
    add = lat[:, 0:1] * lbt[0:1, :]
    for r in range(1, rank):
        add = add + lat[:, r:r + 1] * lbt[r:r + 1, :]

    # Element-wise in f32; MXU operand back in the input dtype so bf16 inputs
    # run at full MXU rate.
    w_eff = (wt_ref[...].astype(jnp.float32) * mult + add).astype(x_ref.dtype)

    acc_ref[...] += jnp.dot(x_ref[...], w_eff,
                            preferred_element_type=jnp.float32)

    @pl.when(k == pl.num_programs(2) - 1)
    def _finalize():
        o_ref[...] = (acc_ref[...] + b_ref[...].astype(jnp.float32)
                      ).astype(o_ref.dtype)


def lora_linear(x, weight, bias, lora_a, lora_b, multi_lora_a, multi_lora_b,
                rank, scaling_rank, *, tm=512, tn=1024, tk=1024,
                compute_dtype=None):
    """x: (batch, seq, in_features) -> (batch, seq, out_features)."""
    batch, seq, in_f = x.shape
    out_f = weight.shape[0]
    tokens = batch * seq
    out_dtype = x.dtype
    cdtype = jnp.dtype(compute_dtype) if compute_dtype is not None \
        else jnp.dtype(out_dtype)
    itemsize = cdtype.itemsize

    # dtype-aware sublane base: bf16 packs two rows / sublane, int8-fp8 four.
    base_m = {4: 8, 2: 16, 1: 32}.get(itemsize, 8)

    TM, Mp = _pick_tile(tokens, tm, base_m)
    TN, Np = _pick_tile(out_f, tn, 128)
    TK, Kp = _pick_tile(in_f, tk, 128)

    # Fused in-kernel W_eff only for decode-like single-M-block calls; for
    # multi-block M, precompute W_eff once in the wrapper (one extra weight
    # pass << (Mp/TM)x redundant VPU rebuild + f32 upcast per step).
    fused = tokens <= TM

    # v7x megacore: make sure the parallel (m, n) grid has >= 2 blocks so
    # dimension_semantics can shard across both TensorCores.
    if (Mp // TM) * (Np // TN) < 2:
        if Np >= 256:
            Np = _round_up(Np, 256)
            TN = Np // 2
        elif Mp >= 2 * base_m:
            Mp = _round_up(Mp, 2 * base_m)
            TM = Mp // 2

    grid = (Mp // TM, Np // TN, Kp // TK)

    # Activations are padded per call (cheap); padded rows/cols are zero and
    # contribute nothing to the reductions.
    x2 = jnp.pad(x.reshape(tokens, in_f).astype(cdtype),
                 ((0, Mp - tokens), (0, Kp - in_f)))
    b_p = jnp.pad(bias.reshape(1, out_f), ((0, 0), (0, Np - out_f)))

    if not fused:
        # TODO(synk): in a real deployment cache this padded W_eff.T at
        # parameter-load time instead of rebuilding it every forward call.
        w_eff = (weight.astype(jnp.float32)
                 * jnp.matmul(multi_lora_b, multi_lora_a,
                              preferred_element_type=jnp.float32)
                 * (1.0 / scaling_rank)
                 + jnp.matmul(lora_b, lora_a,
                              preferred_element_type=jnp.float32)
                 * (1.0 / rank))
        w_t = jnp.pad(w_eff.T.astype(cdtype),
                      ((0, Kp - in_f), (0, Np - out_f)))           # (Kp, Np)
        kernel = _gemm_bias_kernel
        operands = (x2, w_t, b_p)
        in_specs = [
            pl.BlockSpec((TM, TK), lambda m, n, k: (m, k)),        # x
            pl.BlockSpec((TK, TN), lambda m, n, k: (k, n)),        # W_eff.T
            pl.BlockSpec((1, TN), lambda m, n, k: (0, n)),         # bias
        ]
        flops = 2 * Mp * Np * Kp
    else:
        w_t = jnp.pad(weight.T.astype(cdtype),
                      ((0, Kp - in_f), (0, Np - out_f)))           # (Kp, Np)
        lat = jnp.pad(lora_a.T, ((0, Kp - in_f), (0, 0)))          # (Kp, R)
        lbt = jnp.pad(lora_b.T, ((0, 0), (0, Np - out_f)))         # (R, Np)
        mlat = jnp.pad(multi_lora_a.T, ((0, Kp - in_f), (0, 0)))   # (Kp, SR)
        mlbt = jnp.pad(multi_lora_b.T, ((0, 0), (0, Np - out_f)))  # (SR, Np)
        kernel = functools.partial(_fused_lora_kernel, rank=rank,
                                   scaling_rank=scaling_rank)
        operands = (x2, w_t, b_p, lat, lbt, mlat, mlbt)
        in_specs = [
            pl.BlockSpec((TM, TK), lambda m, n, k: (m, k)),            # x
            pl.BlockSpec((TK, TN), lambda m, n, k: (k, n)),            # weight.T
            pl.BlockSpec((1, TN), lambda m, n, k: (0, n)),             # bias
            pl.BlockSpec((TK, rank), lambda m, n, k: (k, 0)),          # lora_a.T
            pl.BlockSpec((rank, TN), lambda m, n, k: (0, n)),          # lora_b.T
            pl.BlockSpec((TK, scaling_rank), lambda m, n, k: (k, 0)),  # mla.T
            pl.BlockSpec((scaling_rank, TN), lambda m, n, k: (0, n)),  # mlb.T
        ]
        flops = 2 * Mp * Np * Kp + 2 * Np * Kp * (rank + scaling_rank + 2)

    # VMEM sizing: double-buffered I/O tiles + f32 accumulator (+ fused-path
    # temporaries), modest headroom, capped at 48 MiB for v7x's 64 MiB VMEM.
    vmem_est = 2 * (TM * TK + TK * TN + TM * TN + TN) * itemsize
    vmem_est += TM * TN * 4
    if fused:
        vmem_est += 2 * (TK + TN) * (rank + scaling_rank) * 4
        vmem_est += 2 * TK * TN * 4
    vmem_limit = int(min(vmem_est + max(vmem_est // 2, 4 << 20), 48 << 20))

    out_itemsize = jnp.dtype(out_dtype).itemsize
    bytes_accessed = int(sum(int(op.size) * op.dtype.itemsize
                             for op in operands) + Mp * Np * out_itemsize)

    # NOTE: if weight-tile DMA ever shows up as exposed latency at large TN/TK,
    # add pipeline_mode=pl.Buffered(3) on the weight BlockSpec.
    out_p = pl.pallas_call(
        kernel,
        out_shape=jax.ShapeDtypeStruct((Mp, Np), out_dtype),
        grid_spec=pltpu.PrefetchScalarGridSpec(
            num_scalar_prefetch=0,
            grid=grid,
            in_specs=in_specs,
            out_specs=pl.BlockSpec((TM, TN), lambda m, n, k: (m, n)),
            scratch_shapes=[pltpu.VMEM((TM, TN), jnp.float32)],
        ),
        compiler_params=pltpu.CompilerParams(
            dimension_semantics=("parallel", "parallel", "arbitrary"),
            vmem_limit_bytes=vmem_limit,
        ),
        cost_estimate=pl.CostEstimate(
            flops=flops, transcendentals=0, bytes_accessed=bytes_accessed),
    )(*operands)

    return out_p[:tokens, :out_f].reshape(batch, seq, out_f)


def reference(x, weight, bias, lora_a, lora_b, multi_lora_a, multi_lora_b,
              rank, scaling_rank):
    w = weight * (multi_lora_b @ multi_lora_a) / scaling_rank
    w = w + (lora_b @ lora_a) / rank
    return jnp.einsum("bsi,oi->bso", x, w,
                      precision=lax.Precision.HIGHEST) + bias


def _make_params(key, in_features, out_features, rank, scaling_rank,
                 init_scale=0.01):
    k_w, k_b, k_la, k_mla = jax.random.split(key, 4)
    weight = jax.random.normal(k_w, (out_features, in_features), jnp.float32) * 0.02
    bias = jax.random.normal(k_b, (out_features,), jnp.float32) * 0.02
    lora_a = jax.random.normal(k_la, (rank, in_features), jnp.float32) * init_scale
    lora_b = jnp.zeros((out_features, rank), jnp.float32)
    multi_lora_a = (jnp.ones((scaling_rank, in_features), jnp.float32)
                    + jax.random.normal(k_mla, (scaling_rank, in_features),
                                        jnp.float32) * init_scale)
    multi_lora_b = jnp.ones((out_features, scaling_rank), jnp.float32)
    return weight, bias, lora_a, lora_b, multi_lora_a, multi_lora_b


if __name__ == "__main__":
    key = jax.random.PRNGKey(0)
    k1, k2, k3, k4 = jax.random.split(key, 4)
    rank, scaling_rank = 4, 2

    # ---- Test 1: small decode-like shape (fused in-kernel W_eff path). ----
    batch, seq, in_f, out_f = 2, 8, 32, 64
    x = jax.random.normal(k1, (batch, seq, in_f), dtype=jnp.float32)
    params = _make_params(k2, in_f, out_f, rank, scaling_rank)
    out = lora_linear(x, *params, rank, scaling_rank)
    out = jax.block_until_ready(out)
    ref = reference(x, *params, rank, scaling_rank)
    assert out.shape == (batch, seq, out_f)
    assert jnp.allclose(out, ref, atol=2e-4, rtol=1e-3), \
        f"fused path max abs err {jnp.max(jnp.abs(out - ref))}"

    # ---- Test 2: multi-block M / N / K grid (precomputed-W_eff GEMM path),
    # small tiles forced so the K accumulation, pl.when finalize and padding
    # slice-back are all exercised without large compute. ----
    batch2, seq2, in_f2, out_f2 = 3, 100, 384, 256
    x2 = jax.random.normal(k3, (batch2, seq2, in_f2), dtype=jnp.float32)
    params2 = _make_params(k4, in_f2, out_f2, rank, scaling_rank)
    out2 = lora_linear(x2, *params2, rank, scaling_rank, tm=128, tn=128, tk=128)
    out2 = jax.block_until_ready(out2)
    ref2 = reference(x2, *params2, rank, scaling_rank)
    assert out2.shape == (batch2, seq2, out_f2)
    assert jnp.allclose(out2, ref2, atol=1e-3, rtol=1e-3), \
        f"gemm path max abs err {jnp.max(jnp.abs(out2 - ref2))}"

    print("KERNEL_OK")
</pallas_src>

<mosaic_0001>
module attributes {stable_mosaic.version = 11 : i64} {
  func.func @_fused_lora_kernel(%arg0: i32, %arg1: i32, %arg2: i32, %arg3: memref<8x128xf32, #tpu.memory_space<vmem>>, %arg4: memref<128x128xf32, #tpu.memory_space<vmem>>, %arg5: memref<1x128xf32, #tpu.memory_space<vmem>>, %arg6: memref<128x4xf32, #tpu.memory_space<vmem>>, %arg7: memref<4x128xf32, #tpu.memory_space<vmem>>, %arg8: memref<128x2xf32, #tpu.memory_space<vmem>>, %arg9: memref<2x128xf32, #tpu.memory_space<vmem>>, %arg10: memref<8x128xf32, #tpu.memory_space<vmem>>, %arg11: memref<8x128xf32, #tpu.memory_space<vmem>>) attributes {dimension_semantics = [#tpu.dimension_semantics<parallel>, #tpu.dimension_semantics<parallel>, #tpu.dimension_semantics<arbitrary>], iteration_bounds = array<i64: 2, 1, 1>, scalar_prefetch = 0 : i64, scratch_operands = 1 : i64, tpu.core_type = #tpu.core_type<tc>, window_params = [{transform_indices = @transform_0, window_bounds = array<i64: 8, 128>}, {transform_indices = @transform_1, window_bounds = array<i64: 128, 128>}, {transform_indices = @transform_2, window_bounds = array<i64: 1, 128>}, {transform_indices = @transform_3, window_bounds = array<i64: 128, 4>}, {transform_indices = @transform_4, window_bounds = array<i64: 4, 128>}, {transform_indices = @transform_5, window_bounds = array<i64: 128, 2>}, {transform_indices = @transform_6, window_bounds = array<i64: 2, 128>}, {transform_indices = @transform_7, window_bounds = array<i64: 8, 128>}]} {
    %c0_i32 = arith.constant 0 : i32
    %0 = arith.cmpi eq, %arg2, %c0_i32 : i32
    %1 = arith.extui %0 : i1 to i32
    %c0_i32_0 = arith.constant 0 : i32
    %2 = arith.cmpi ne, %1, %c0_i32_0 : i32
    scf.if %2 {
      %cst_20 = arith.constant 0.000000e+00 : f32
      %56 = vector.broadcast %cst_20 : f32 to vector<8x128xf32>
      %c0_21 = arith.constant 0 : index
      %c0_22 = arith.constant 0 : index
      %57 = vector.load %arg11[%c0_21, %c0_22] : memref<8x128xf32, #tpu.memory_space<vmem>>, vector<8x128xf32>
      tpu.vector_store %arg11[%c0_21, %c0_22], %56 {strides = array<i32>} : memref<8x128xf32, #tpu.memory_space<vmem>>, vector<8x128xf32>,
    } else {
    }
    %c0 = arith.constant 0 : index
    %c0_1 = arith.constant 0 : index
    %3 = vector.load %arg8[%c0, %c0_1] : memref<128x2xf32, #tpu.memory_space<vmem>>, vector<128x2xf32>
    %cst = arith.constant 5.000000e-01 : f32
    %4 = vector.broadcast %cst : f32 to vector<128x2xf32>
    %5 = arith.mulf %3, %4 : vector<128x2xf32>
    %c0_2 = arith.constant 0 : index
    %c0_3 = arith.constant 0 : index
    %6 = vector.load %arg9[%c0_2, %c0_3] : memref<2x128xf32, #tpu.memory_space<vmem>>, vector<2x128xf32>
    %7 = vector.extract_strided_slice %5 {offsets = [0, 0], sizes = [128, 1], strides = [1, 1]} : vector<128x2xf32> to vector<128x1xf32>
    %8 = vector.extract_strided_slice %6 {offsets = [0, 0], sizes = [1, 128], strides = [1, 1]} : vector<2x128xf32> to vector<1x128xf32>
    %9 = vector.broadcast %7 : vector<128x1xf32> to vector<128x128xf32>
    %10 = vector.broadcast %8 : vector<1x128xf32> to vector<128x128xf32>
    %11 = arith.mulf %9, %10 : vector<128x128xf32>
    %12 = vector.extract_strided_slice %5 {offsets = [0, 1], sizes = [128, 1], strides = [1, 1]} : vector<128x2xf32> to vector<128x1xf32>
    %13 = vector.extract_strided_slice %6 {offsets = [1, 0], sizes = [1, 128], strides = [1, 1]} : vector<2x128xf32> to vector<1x128xf32>
    %14 = vector.broadcast %12 : vector<128x1xf32> to vector<128x128xf32>
    %15 = vector.broadcast %13 : vector<1x128xf32> to vector<128x128xf32>
    %16 = arith.mulf %14, %15 : vector<128x128xf32>
    %17 = arith.addf %11, %16 : vector<128x128xf32>
    %c0_4 = arith.constant 0 : index
    %c0_5 = arith.constant 0 : index
    %18 = vector.load %arg6[%c0_4, %c0_5] : memref<128x4xf32, #tpu.memory_space<vmem>>, vector<128x4xf32>
    %cst_6 = arith.constant 2.500000e-01 : f32
    %19 = vector.broadcast %cst_6 : f32 to vector<128x4xf32>
    %20 = arith.mulf %18, %19 : vector<128x4xf32>
    %c0_7 = arith.constant 0 : index
    %c0_8 = arith.constant 0 : index
    %21 = vector.load %arg7[%c0_7, %c0_8] : memref<4x128xf32, #tpu.memory_space<vmem>>, vector<4x128xf32>
    %22 = vector.extract_strided_slice %20 {offsets = [0, 0], sizes = [128, 1], strides = [1, 1]} : vector<128x4xf32> to vector<128x1xf32>
    %23 = vector.extract_strided_slice %21 {offsets = [0, 0], sizes = [1, 128], strides = [1, 1]} : vector<4x128xf32> to vector<1x128xf32>
    %24 = vector.broadcast %22 : vector<128x1xf32> to vector<128x128xf32>
    %25 = vector.broadcast %23 : vector<1x128xf32> to vector<128x128xf32>
    %26 = arith.mulf %24, %25 : vector<128x128xf32>
    %27 = vector.extract_strided_slice %20 {offsets = [0, 1], sizes = [128, 1], strides = [1, 1]} : vector<128x4xf32> to vector<128x1xf32>
    %28 = vector.extract_strided_slice %21 {offsets = [1, 0], sizes = [1, 128], strides = [1, 1]} : vector<4x128xf32> to vector<1x128xf32>
    %29 = vector.broadcast %27 : vector<128x1xf32> to vector<128x128xf32>
    %30 = vector.broadcast %28 : vector<1x128xf32> to vector<128x128xf32>
    %31 = arith.mulf %29, %30 : vector<128x128xf32>
    %32 = arith.addf %26, %31 : vector<128x128xf32>
    %33 = vector.extract_strided_slice %20 {offsets = [0, 2], sizes = [128, 1], strides = [1, 1]} : vector<128x4xf32> to vector<128x1xf32>
    %34 = vector.extract_strided_slice %21 {offsets = [2, 0], sizes = [1, 128], strides = [1, 1]} : vector<4x128xf32> to vector<1x128xf32>
    %35 = vector.broadcast %33 : vector<128x1xf32> to vector<128x128xf32>
    %36 = vector.broadcast %34 : vector<1x128xf32> to vector<128x128xf32>
    %37 = arith.mulf %35, %36 : vector<128x128xf32>
    %38 = arith.addf %32, %37 : vector<128x128xf32>
    %39 = vector.extract_strided_slice %20 {offsets = [0, 3], sizes = [128, 1], strides = [1, 1]} : vector<128x4xf32> to vector<128x1xf32>
    %40 = vector.extract_strided_slice %21 {offsets = [3, 0], sizes = [1, 128], strides = [1, 1]} : vector<4x128xf32> to vector<1x128xf32>
    %41 = vector.broadcast %39 : vector<128x1xf32> to vector<128x128xf32>
    %42 = vector.broadcast %40 : vector<1x128xf32> to vector<128x128xf32>
    %43 = arith.mulf %41, %42 : vector<128x128xf32>
    %44 = arith.addf %38, %43 : vector<128x128xf32>
    %c0_9 = arith.constant 0 : index
    %c0_10 = arith.constant 0 : index
    %45 = vector.load %arg4[%c0_9, %c0_10] : memref<128x128xf32, #tpu.memory_space<vmem>>, vector<128x128xf32>
    %46 = arith.mulf %45, %17 : vector<128x128xf32>
    %47 = arith.addf %46, %44 : vector<128x128xf32>
    %c0_11 = arith.constant 0 : index
    %c0_12 = arith.constant 0 : index
    %48 = vector.load %arg11[%c0_11, %c0_12] : memref<8x128xf32, #tpu.memory_space<vmem>>, vector<8x128xf32>
    %c0_13 = arith.constant 0 : index
    %c0_14 = arith.constant 0 : index
    %49 = vector.load %arg3[%c0_13, %c0_14] : memref<8x128xf32, #tpu.memory_space<vmem>>, vector<8x128xf32>
    %cst_15 = arith.constant dense<0.000000e+00> : vector<8x128xf32>
    %50 = tpu.matmul %49, %47, %cst_15 {dimension_numbers = #tpu.dot_dimension_numbers<[1], [0], [0], [1], [0, 0, 1, 1], [], []>} : vector<8x128xf32>, vector<128x128xf32>, vector<8x128xf32> -> vector<8x128xf32>
    %51 = arith.addf %48, %50 : vector<8x128xf32>
    %c0_16 = arith.constant 0 : index
    %c0_17 = arith.constant 0 : index
    %52 = vector.load %arg11[%c0_16, %c0_17] : memref<8x128xf32, #tpu.memory_space<vmem>>, vector<8x128xf32>
    tpu.vector_store %arg11[%c0_16, %c0_17], %51 {strides = array<i32>} : memref<8x128xf32, #tpu.memory_space<vmem>>, vector<8x128xf32>,
    %c0_i32_18 = arith.constant 0 : i32
    %53 = arith.cmpi eq, %arg2, %c0_i32_18 : i32
    %54 = arith.extui %53 : i1 to i32
    %c0_i32_19 = arith.constant 0 : i32
    %55 = arith.cmpi ne, %54, %c0_i32_19 : i32
    scf.if %55 {
      %c0_20 = arith.constant 0 : index
      %c0_21 = arith.constant 0 : index
      %56 = vector.load %arg11[%c0_20, %c0_21] : memref<8x128xf32, #tpu.memory_space<vmem>>, vector<8x128xf32>
      %c0_22 = arith.constant 0 : index
      %c0_23 = arith.constant 0 : index
      %57 = vector.load %arg5[%c0_22, %c0_23] : memref<1x128xf32, #tpu.memory_space<vmem>>, vector<1x128xf32>
      %58 = vector.broadcast %57 : vector<1x128xf32> to vector<8x128xf32>
      %59 = arith.addf %56, %58 : vector<8x128xf32>
      %c0_24 = arith.constant 0 : index
      %c0_25 = arith.constant 0 : index
      %60 = vector.load %arg10[%c0_24, %c0_25] : memref<8x128xf32, #tpu.memory_space<vmem>>, vector<8x128xf32>
      tpu.vector_store %arg10[%c0_24, %c0_25], %59 {strides = array<i32>} : memref<8x128xf32, #tpu.memory_space<vmem>>, vector<8x128xf32>,
    } else {
    }
    return
  }
  func.func @transform_0(%arg0: i32, %arg1: i32, %arg2: i32) -> (i32, i32) {
    %c0_i32 = arith.constant 0 : i32
    return %arg0, %arg2 : i32, i32
  }
  func.func @transform_1(%arg0: i32, %arg1: i32, %arg2: i32) -> (i32, i32) {
    %c0_i32 = arith.constant 0 : i32
    return %arg2, %arg1 : i32, i32
  }
  func.func @transform_2(%arg0: i32, %arg1: i32, %arg2: i32) -> (i32, i32) {
    %c0_i32 = arith.constant 0 : i32
    %c0_i32_0 = arith.constant 0 : i32
    return %c0_i32, %arg1 : i32, i32
  }
  func.func @transform_3(%arg0: i32, %arg1: i32, %arg2: i32) -> (i32, i32) {
    %c0_i32 = arith.constant 0 : i32
    %c0_i32_0 = arith.constant 0 : i32
    return %arg2, %c0_i32 : i32, i32
  }
  func.func @transform_4(%arg0: i32, %arg1: i32, %arg2: i32) -> (i32, i32) {
    %c0_i32 = arith.constant 0 : i32
    %c0_i32_0 = arith.constant 0 : i32
    return %c0_i32, %arg1 : i32, i32
  }
  func.func @transform_5(%arg0: i32, %arg1: i32, %arg2: i32) -> (i32, i32) {
    %c0_i32 = arith.constant 0 : i32
    %c0_i32_0 = arith.constant 0 : i32
    return %arg2, %c0_i32 : i32, i32
  }
  func.func @transform_6(%arg0: i32, %arg1: i32, %arg2: i32) -> (i32, i32) {
    %c0_i32 = arith.constant 0 : i32
    %c0_i32_0 = arith.constant 0 : i32
    return %c0_i32, %arg1 : i32, i32
  }
  func.func @transform_7(%arg0: i32, %arg1: i32, %arg2: i32) -> (i32, i32) {
    %c0_i32 = arith.constant 0 : i32
    return %arg0, %arg1 : i32, i32
  }
}

</mosaic_0001>

<llo_original>
// kernel: tpu_custom_call.1
$region0: #{tpu_custom_call.1}
  #allocation0 [shape = 'u32[]', space=smem, size = 0x4, offset = 0x4, fixed_abs, tag = 'smem constant byte address 0x4 - core index']
  #allocation1 [shape = 'u32[72,128]{1,0:T(1,128)}', space=vmem, size = 0x9000, scoped, tag = 'internal scratch']
  #allocation2 [shape = 'f32[8,128]{1,0:T(8,128)}', space=vmem, size = 0x1000, scoped, tag = 'scratch operand']
  %s0 = inlined_call_operand.vmem [shape: f32[16,128], index: 0, kind: input, shape index: {}]
  %s1 = inlined_call_operand.vmem [shape: f32[128,128], index: 1, kind: input, shape index: {}]
  %s2 = inlined_call_operand.vmem [shape: f32[1,128], index: 2, kind: input, shape index: {}]
  %s3 = inlined_call_operand.vmem [shape: f32[128,4], index: 3, kind: input, shape index: {}]
  %s4 = inlined_call_operand.vmem [shape: f32[4,128], index: 4, kind: input, shape index: {}]
  %s5 = inlined_call_operand.vmem [shape: f32[128,2], index: 5, kind: input, shape index: {}]
  %s6 = inlined_call_operand.vmem [shape: f32[2,128], index: 6, kind: input, shape index: {}]
  %s7 = inlined_call_operand.hbm [shape: f32[16,128], index: 7, kind: output, shape index: {}]
  %s8 = sld [smem:[#allocation0]]
  $region69: #{tpu_custom_call.1} parent=0
    _
  %s10 = ssub.s32 1, %s8
  %s11 = scalar_select 0, %s10, %s8
  $region1: #{tpu_custom_call.1} parent=0
    #allocation3 [shape = 'u8[8192]{0}', space=vmem, size = 0x2000, scoped, tag = 'output window, operand 0']
    #allocation4 [shape = 's32[2]{0}', space=sflag, size = 0x8, scoped, tag = 'scoped memory for tpu_custom_call.1']
    %12 = vsyncpa [#allocation4], 0
    %s13 = scalar_lea.sflag [#allocation4], 1
    %14 = vsyncpa %s13, 0
    loop: start=0, step=1, limit=4
    $region2: #{tpu_custom_call.1} parent=1 // loop_pre_header
      _
    $region3: #{tpu_custom_call.1} parent=1 // loop_header
      %s16 = sphi 0, %s20
      %p17 = scmp.ge.s32.totalorder %s16, 4
      %s23 = sphi 0, %s42
      %s24 = sphi 0, %s38
      %s25 = sphi 0, %s34
      %s26 = sphi 0, %s23
      %s27 = sphi 0, %s24
      %s28 = sphi 0, %s25
      %s29 = sphi 0, %s26
      %s30 = sphi 0, %s27
      %s31 = sphi 0, %s28
      %s47 = sphi 0, %s49
      %s50 = sphi 0, %s47
      %s51 = sphi 0, %s50
      %s67 = sphi 0, %s51
      %s75 = sphi 0, %s77
      %s78 = sphi 0, %s75
      %s79 = sphi 0, %s78
      %s95 = sphi 0, %s79
      %s101 = sphi 0, %s103
      %s104 = sphi 0, %s101
      %s105 = sphi 0, %s104
      %s121 = sphi 0, %s105
      %s127 = sphi 0, %s129
      %s130 = sphi 0, %s127
      %s131 = sphi 0, %s130
      %s147 = sphi 0, %s131
      %s153 = sphi 0, %s155
      %s156 = sphi 0, %s153
      %s157 = sphi 0, %s156
      %s173 = sphi 0, %s157
      %s179 = sphi 0, %s181
      %s182 = sphi 0, %s179
      %s183 = sphi 0, %s182
      %s199 = sphi 0, %s183
      %s205 = sphi 0, %s207
      %s208 = sphi 0, %s205
      %s209 = sphi 0, %s208
      %s225 = sphi 0, %s209
      %s233 = sphi 0, %s235
      %s236 = sphi 0, %s233
      %s237 = sphi 0, %s236
      %s253 = sphi 0, %s237
    $region4: #{tpu_custom_call.1} parent=1 // loop_header_branch
      %19 = sbr.rel (%p17) target = $region8
    $region5: #{tpu_custom_call.1} parent=1 // loop_body
      %s21 = ssub.s32 %s16, 1
      %s22 = ssub.s32 %s16, 2
      %s32 = sadd.s32 1, %s25
      %p33 = scmp.ge.s32.totalorder %s32, 1
      %s34 = scalar_select %p33, 0, %s32
      %s35 = sadd.s32 1, %s24
      %s36 = scalar_select %p33, %s35, %s24
      %p37 = scmp.ge.s32.totalorder %s36, 1
      %s38 = scalar_select %p37, 0, %s36
      %s39 = sadd.s32 1, %s23
      %s40 = scalar_select %p37, %s39, %s23
      %p41 = scmp.ge.s32.totalorder %s40, 2
      %s42 = scalar_select %p41, 0, %s40
      %s43 = ssub.s32 %s23, %s42
      %s44 = ssub.s32 %s25, %s34
      %s45 = sor.u32 %s43, %s44
      %p46 = scmp.eq.s32.totalorder %s45, 0
      %s48 = sadd.s32 %s47, 1
      %s49 = scalar_select %p46, %s47, %s48
      %p52 = pneg %p46
      %p53 = scmp.eq.s32.totalorder %s16, 1
      %p54 = por %p52, %p53
      %p55 = scmp.ne.s32.totalorder %s47, %s50
      %p56 = scmp.eq.s32.totalorder %s16, 0
      %p57 = por %p55, %p56
      %p58 = scmp.ne.s32.totalorder %s47, %s50
      %p59 = scmp.eq.s32.totalorder %s21, 1
      %p60 = por %p58, %p59
      %p61 = scmp.ne.s32.totalorder %s50, %s51
      %p62 = scmp.eq.s32.totalorder %s21, 0
      %p63 = por %p61, %p62
      %p64 = scmp.ne.s32.totalorder %s50, %s51
      %p65 = scmp.eq.s32.totalorder %s22, 1
      %p66 = por %p64, %p65
      %p68 = scmp.ne.s32.totalorder %s51, %s67
      %p69 = scmp.eq.s32.totalorder %s22, 0
      %p70 = por %p68, %p69
      %s71 = ssub.s32 %s25, %s34
      %s72 = ssub.s32 %s24, %s38
      %s73 = sor.u32 %s71, %s72
      %p74 = scmp.eq.s32.totalorder %s73, 0
      %s76 = sadd.s32 %s75, 1
      %s77 = scalar_select %p74, %s75, %s76
      %p80 = pneg %p74
      %p81 = scmp.eq.s32.totalorder %s16, 1
      %p82 = por %p80, %p81
      %p83 = scmp.ne.s32.totalorder %s75, %s78
      %p84 = scmp.eq.s32.totalorder %s16, 0
      %p85 = por %p83, %p84
      %p86 = scmp.ne.s32.totalorder %s75, %s78
      %p87 = scmp.eq.s32.totalorder %s21, 1
      %p88 = por %p86, %p87
      %p89 = scmp.ne.s32.totalorder %s78, %s79
      %p90 = scmp.eq.s32.totalorder %s21, 0
      %p91 = por %p89, %p90
      %p92 = scmp.ne.s32.totalorder %s78, %s79
      %p93 = scmp.eq.s32.totalorder %s22, 1
      %p94 = por %p92, %p93
      %p96 = scmp.ne.s32.totalorder %s79, %s95
      %p97 = scmp.eq.s32.totalorder %s22, 0
      %p98 = por %p96, %p97
      %s99 = ssub.s32 %s24, %s38
      %p100 = scmp.eq.s32.totalorder %s99, 0
      %s102 = sadd.s32 %s101, 1
      %s103 = scalar_select %p100, %s101, %s102
      %p106 = pneg %p100
      %p107 = scmp.eq.s32.totalorder %s16, 1
      %p108 = por %p106, %p107
      %p109 = scmp.ne.s32.totalorder %s101, %s104
      %p110 = scmp.eq.s32.totalorder %s16, 0
      %p111 = por %p109, %p110
      %p112 = scmp.ne.s32.totalorder %s101, %s104
      %p113 = scmp.eq.s32.totalorder %s21, 1
      %p114 = por %p112, %p113
      %p115 = scmp.ne.s32.totalorder %s104, %s105
      %p116 = scmp.eq.s32.totalorder %s21, 0
      %p117 = por %p115, %p116
      %p118 = scmp.ne.s32.totalorder %s104, %s105
      %p119 = scmp.eq.s32.totalorder %s22, 1
      %p120 = por %p118, %p119
      %p122 = scmp.ne.s32.totalorder %s105, %s121
      %p123 = scmp.eq.s32.totalorder %s22, 0
      %p124 = por %p122, %p123
      %s125 = ssub.s32 %s25, %s34
      %p126 = scmp.eq.s32.totalorder %s125, 0
      %s128 = sadd.s32 %s127, 1
      %s129 = scalar_select %p126, %s127, %s128
      %p132 = pneg %p126
      %p133 = scmp.eq.s32.totalorder %s16, 1
      %p134 = por %p132, %p133
      %p135 = scmp.ne.s32.totalorder %s127, %s130
      %p136 = scmp.eq.s32.totalorder %s16, 0
      %p137 = por %p135, %p136
      %p138 = scmp.ne.s32.totalorder %s127, %s130
      %p139 = scmp.eq.s32.totalorder %s21, 1
      %p140 = por %p138, %p139
      %p141 = scmp.ne.s32.totalorder %s130, %s131
      %p142 = scmp.eq.s32.totalorder %s21, 0
      %p143 = por %p141, %p142
      %p144 = scmp.ne.s32.totalorder %s130, %s131
      %p145 = scmp.eq.s32.totalorder %s22, 1
      %p146 = por %p144, %p145
      %p148 = scmp.ne.s32.totalorder %s131, %s147
      %p149 = scmp.eq.s32.totalorder %s22, 0
      %p150 = por %p148, %p149
      %s151 = ssub.s32 %s24, %s38
      %p152 = scmp.eq.s32.totalorder %s151, 0
      %s154 = sadd.s32 %s153, 1
      %s155 = scalar_select %p152, %s153, %s154
      %p158 = pneg %p152
      %p159 = scmp.eq.s32.totalorder %s16, 1
      %p160 = por %p158, %p159
      %p161 = scmp.ne.s32.totalorder %s153, %s156
      %p162 = scmp.eq.s32.totalorder %s16, 0
      %p163 = por %p161, %p162
      %p164 = scmp.ne.s32.totalorder %s153, %s156
      %p165 = scmp.eq.s32.totalorder %s21, 1
      %p166 = por %p164, %p165
      %p167 = scmp.ne.s32.totalorder %s156, %s157
      %p168 = scmp.eq.s32.totalorder %s21, 0
      %p169 = por %p167, %p168
      %p170 = scmp.ne.s32.totalorder %s156, %s157
      %p171 = scmp.eq.s32.totalorder %s22, 1
      %p172 = por %p170, %p171
      %p174 = scmp.ne.s32.totalorder %s157, %s173
      %p175 = scmp.eq.s32.totalorder %s22, 0
      %p176 = por %p174, %p175
      %s177 = ssub.s32 %s25, %s34
      %p178 = scmp.eq.s32.totalorder %s177, 0
      %s180 = sadd.s32 %s179, 1
      %s181 = scalar_select %p178, %s179, %s180
      %p184 = pneg %p178
      %p185 = scmp.eq.s32.totalorder %s16, 1
      %p186 = por %p184, %p185
      %p187 = scmp.ne.s32.totalorder %s179, %s182
      %p188 = scmp.eq.s32.totalorder %s16, 0
      %p189 = por %p187, %p188
      %p190 = scmp.ne.s32.totalorder %s179, %s182
      %p191 = scmp.eq.s32.totalorder %s21, 1
      %p192 = por %p190, %p191
      %p193 = scmp.ne.s32.totalorder %s182, %s183
      %p194 = scmp.eq.s32.totalorder %s21, 0
      %p195 = por %p193, %p194
      %p196 = scmp.ne.s32.totalorder %s182, %s183
      %p197 = scmp.eq.s32.totalorder %s22, 1
      %p198 = por %p196, %p197
      %p200 = scmp.ne.s32.totalorder %s183, %s199
      %p201 = scmp.eq.s32.totalorder %s22, 0
      %p202 = por %p200, %p201
      %s203 = ssub.s32 %s24, %s38
      %p204 = scmp.eq.s32.totalorder %s203, 0
      %s206 = sadd.s32 %s205, 1
      %s207 = scalar_select %p204, %s205, %s206
      %p210 = pneg %p204
      %p211 = scmp.eq.s32.totalorder %s16, 1
      %p212 = por %p210, %p211
      %p213 = scmp.ne.s32.totalorder %s205, %s208
      %p214 = scmp.eq.s32.totalorder %s16, 0
      %p215 = por %p213, %p214
      %p216 = scmp.ne.s32.totalorder %s205, %s208
      %p217 = scmp.eq.s32.totalorder %s21, 1
      %p218 = por %p216, %p217
      %p219 = scmp.ne.s32.totalorder %s208, %s209
      %p220 = scmp.eq.s32.totalorder %s21, 0
      %p221 = por %p219, %p220
      %p222 = scmp.ne.s32.totalorder %s208, %s209
      %p223 = scmp.eq.s32.totalorder %s22, 1
      %p224 = por %p222, %p223
      %p226 = scmp.ne.s32.totalorder %s209, %s225
      %p227 = scmp.eq.s32.totalorder %s22, 0
      %p228 = por %p226, %p227
      %s229 = ssub.s32 %s23, %s42
      %s230 = ssub.s32 %s24, %s38
      %s231 = sor.u32 %s229, %s230
      %p232 = scmp.eq.s32.totalorder %s231, 0
      %s234 = sadd.s32 %s233, 1
      %s235 = scalar_select %p232, %s233, %s234
      %p238 = pneg %p232
      %p239 = scmp.eq.s32.totalorder %s16, 1
      %p240 = por %p238, %p239
      %p241 = scmp.ne.s32.totalorder %s233, %s236
      %p242 = scmp.eq.s32.totalorder %s16, 0
      %p243 = por %p241, %p242
      %p244 = scmp.ne.s32.totalorder %s233, %s236
      %p245 = scmp.eq.s32.totalorder %s21, 1
      %p246 = por %p244, %p245
      %p247 = scmp.ne.s32.totalorder %s236, %s237
      %p248 = scmp.eq.s32.totalorder %s21, 0
      %p249 = por %p247, %p248
      %p250 = scmp.ne.s32.totalorder %s236, %s237
      %p251 = scmp.eq.s32.totalorder %s22, 1
      %p252 = por %p250, %p251
      %p254 = scmp.ne.s32.totalorder %s237, %s253
      %p255 = scmp.eq.s32.totalorder %s22, 0
      %p256 = por %p254, %p255
      %p257 = scmp.le.s32.totalorder 1, %s16
      %p258 = scmp.lt.s32.totalorder %s16, 3
      %p259 = pnand %p257, %p258
      %p260 = pneg %p259
      // Predicated region
      $region9: #{tpu_custom_call.1} parent=5 // pred_check
        _
      $region10: #{tpu_custom_call.1} parent=5 // pred_check_branch
        %262 = sbr.rel (%p259) target = $region12
      $region11: #{tpu_custom_call.1} parent=5 // pred_region
        %s263 = ssub.s32 %s16, 1
        // Predicated region
        $region13: #{tpu_custom_call.1} parent=11 // pred_check
          %p264 = pneg %p91
        $region14: #{tpu_custom_call.1} parent=11 // pred_check_branch
          %266 = sbr.rel (%p264) target = $region16
        $region15: #{tpu_custom_call.1} parent=11 // pred_region
          %s267 = smul.u32 16, %s28
          %p268 = scmp.lt.s32.totalorder %s267, 15
          %s269 = scalar_select %p268, %s267, 15
          %p270 = scmp.lt.s32.totalorder %s27, 0
          %s271 = scalar_select %p270, %s27, 0
          %s272 = sadd.s32 %s271, %s269
          %s273 = smul.addr %s272, 8
          %s274 = scalar_lea.vmem %s1, %s273
          %s275 = smul.u32 16, %s28
        $region16: #{tpu_custom_call.1} parent=11 // pred_fallthru
          _
        // Predicated region
        $region17: #{tpu_custom_call.1} parent=11 // pred_check
          %p276 = pneg %p117
        $region18: #{tpu_custom_call.1} parent=11 // pred_check_branch
          %278 = sbr.rel (%p276) target = $region20
        $region19: #{tpu_custom_call.1} parent=11 // pred_region
          %p279 = scmp.lt.s32.totalorder %s27, 0
          %s280 = scalar_select %p279, %s27, 0
          %s281 = scalar_lea.vmem %s2, %s280
        $region20: #{tpu_custom_call.1} parent=11 // pred_fallthru
          _
        // Predicated region
        $region21: #{tpu_custom_call.1} parent=11 // pred_check
          %p282 = pneg %p143
        $region22: #{tpu_custom_call.1} parent=11 // pred_check_branch
          %284 = sbr.rel (%p282) target = $region24
        $region23: #{tpu_custom_call.1} parent=11 // pred_region
          %s285 = smul.u32 16, %s28
          %p286 = scmp.lt.s32.totalorder %s285, 15
          %s287 = scalar_select %p286, %s285, 15
          %s288 = smul.addr %s287, 8
          %s289 = scalar_lea.vmem %s3, %s288
          %s290 = smul.u32 16, %s28
        $region24: #{tpu_custom_call.1} parent=11 // pred_fallthru
          _
        // Predicated region
        $region25: #{tpu_custom_call.1} parent=11 // pred_check
          %p291 = pneg %p169
        $region26: #{tpu_custom_call.1} parent=11 // pred_check_branch
          %293 = sbr.rel (%p291) target = $region28
        $region27: #{tpu_custom_call.1} parent=11 // pred_region
          %p294 = scmp.lt.s32.totalorder %s27, 0
          %s295 = scalar_select %p294, %s27, 0
          %s296 = smul.addr %s295, 4
          %s297 = scalar_lea.vmem %s4, %s296
        $region28: #{tpu_custom_call.1} parent=11 // pred_fallthru
          _
        // Predicated region
        $region29: #{tpu_custom_call.1} parent=11 // pred_check
          %p298 = pneg %p195
        $region30: #{tpu_custom_call.1} parent=11 // pred_check_branch
          %300 = sbr.rel (%p298) target = $region32
        $region31: #{tpu_custom_call.1} parent=11 // pred_region
          %s301 = smul.u32 16, %s28
          %p302 = scmp.lt.s32.totalorder %s301, 15
          %s303 = scalar_select %p302, %s301, 15
          %s304 = smul.addr %s303, 8
          %s305 = scalar_lea.vmem %s5, %s304
          %s306 = smul.u32 16, %s28
        $region32: #{tpu_custom_call.1} parent=11 // pred_fallthru
          _
        // Predicated region
        $region33: #{tpu_custom_call.1} parent=11 // pred_check
          %p307 = pneg %p221
        $region34: #{tpu_custom_call.1} parent=11 // pred_check_branch
          %309 = sbr.rel (%p307) target = $region36
        $region35: #{tpu_custom_call.1} parent=11 // pred_region
          %p310 = scmp.lt.s32.totalorder %s27, 0
          %s311 = scalar_select %p310, %s27, 0
          %s312 = smul.addr %s311, 2
          %s313 = scalar_lea.vmem %s6, %s312
        $region36: #{tpu_custom_call.1} parent=11 // pred_fallthru
          _
      $region12: #{tpu_custom_call.1} parent=5 // pred_fallthru
        _
      %p314 = scmp.lt.s32.totalorder %s16, 2
      // Predicated region
      $region37: #{tpu_custom_call.1} parent=5 // pred_check
        %p315 = pneg %p314
      $region38: #{tpu_custom_call.1} parent=5 // pred_check_branch
        %317 = sbr.rel (%p315) target = $region40
      $region39: #{tpu_custom_call.1} parent=5 // pred_region
        // Predicated region
        $region41: #{tpu_custom_call.1} parent=39 // pred_check
          %p318 = pneg %p57
        $region42: #{tpu_custom_call.1} parent=39 // pred_check_branch
          %320 = sbr.rel (%p318) target = $region44
        $region43: #{tpu_custom_call.1} parent=39 // pred_region
          %p321 = scmp.lt.s32.totalorder %s23, 1
          %s322 = scalar_select %p321, %s23, 1
          %p323 = scmp.lt.s32.totalorder %s25, 0
          %s324 = scalar_select %p323, %s25, 0
          %s325 = sadd.s32 %s324, %s322
          %s326 = smul.addr %s325, 8
          %s327 = scalar_lea.vmem %s0, %s326
        $region44: #{tpu_custom_call.1} parent=39 // pred_fallthru
          _
      $region40: #{tpu_custom_call.1} parent=5 // pred_fallthru
        _
      %p328 = scmp.le.s32.totalorder 1, %s16
      %p329 = scmp.lt.s32.totalorder %s16, 3
      %p330 = pnand %p328, %p329
      %p331 = pneg %p330
      // Predicated region
      $region45: #{tpu_custom_call.1} parent=5 // pred_check
        _
      $region46: #{tpu_custom_call.1} parent=5 // pred_check_branch
        %333 = sbr.rel (%p330) target = $region48
      $region47: #{tpu_custom_call.1} parent=5 // pred_region
        %s334 = ssub.s32 %s16, 1
        %p335 = scmp.lt.s32.totalorder %s26, 1
        %s336 = scalar_select %p335, %s26, 1
        %p337 = scmp.lt.s32.totalorder %s28, 0
        %s338 = scalar_select %p337, %s28, 0
        %s339 = sadd.s32 %s338, %s336
        %s340 = smul.addr %s339, 8
        %s341 = scalar_lea.vmem %s0, %s340
        %p342 = pneg %p63
        %p343 = pneg %p60
        %s344 = smul.u32 16, %s28
        %p345 = scmp.lt.s32.totalorder %s344, 15
        %s346 = scalar_select %p345, %s344, 15
        %p347 = scmp.lt.s32.totalorder %s27, 0
        %s348 = scalar_select %p347, %s27, 0
        %s349 = sadd.s32 %s348, %s346
        %s350 = smul.addr %s349, 8
        %s351 = scalar_lea.vmem %s1, %s350
        %p352 = pneg %p91
        %p353 = pneg %p88
        %p354 = scmp.lt.s32.totalorder %s27, 0
        %s355 = scalar_select %p354, %s27, 0
        %s356 = scalar_lea.vmem %s2, %s355
        %p357 = pneg %p117
        %p358 = pneg %p114
        %s359 = smul.u32 16, %s28
        %p360 = scmp.lt.s32.totalorder %s359, 15
        %s361 = scalar_select %p360, %s359, 15
        %s362 = smul.addr %s361, 8
        %s363 = scalar_lea.vmem %s3, %s362
        %p364 = pneg %p143
        %p365 = pneg %p140
        %p366 = scmp.lt.s32.totalorder %s27, 0
        %s367 = scalar_select %p366, %s27, 0
        %s368 = smul.addr %s367, 4
        %s369 = scalar_lea.vmem %s4, %s368
        %p370 = pneg %p169
        %p371 = pneg %p166
        %s372 = smul.u32 16, %s28
        %p373 = scmp.lt.s32.totalorder %s372, 15
        %s374 = scalar_select %p373, %s372, 15
        %s375 = smul.addr %s374, 8
        %s376 = scalar_lea.vmem %s5, %s375
        %p377 = pneg %p195
        %p378 = pneg %p192
        %p379 = scmp.lt.s32.totalorder %s27, 0
        %s380 = scalar_select %p379, %s27, 0
        %s381 = smul.addr %s380, 2
        %s382 = scalar_lea.vmem %s6, %s381
        %p383 = pneg %p221
        %p384 = pneg %p218
        %p385 = pneg %p249
        %p386 = pneg %p246
        %s387 = sand.u32 %s236, 1
        %s388 = scalar_lea.sflag [#allocation4], %s387
        %s389 = sand.u32 %s236, 1
        %s390 = smul.addr %s389, 8
        %s391 = scalar_lea.vmem [#allocation3], %s390
        %p392 = scmp.lt.s32.totalorder %s26, 1
        %s393 = scalar_select %p392, %s26, 1
        %p394 = scmp.lt.s32.totalorder %s28, 0
        %s395 = scalar_select %p394, %s28, 0
        %s396 = sadd.s32 %s395, %s393
        %s397 = smul.addr %s396, 8
        %s398 = scalar_lea.vmem %s0, %s397
        %s399 = smul.u32 16, %s28
        %p400 = scmp.lt.s32.totalorder %s399, 15
        %s401 = scalar_select %p400, %s399, 15
        %p402 = scmp.lt.s32.totalorder %s27, 0
        %s403 = scalar_select %p402, %s27, 0
        %s404 = sadd.s32 %s403, %s401
        %s405 = smul.addr %s404, 8
        %s406 = scalar_lea.vmem %s1, %s405
        %s407 = smul.u32 16, %s28
        %p408 = scmp.lt.s32.totalorder %s27, 0
        %s409 = scalar_select %p408, %s27, 0
        %s410 = scalar_lea.vmem %s2, %s409
        %s411 = smul.u32 16, %s28
        %p412 = scmp.lt.s32.totalorder %s411, 15
        %s413 = scalar_select %p412, %s411, 15
        %s414 = smul.addr %s413, 8
        %s415 = scalar_lea.vmem %s3, %s414
        %s416 = smul.u32 16, %s28
        %p417 = scmp.lt.s32.totalorder %s27, 0
        %s418 = scalar_select %p417, %s27, 0
        %s419 = smul.addr %s418, 4
        %s420 = scalar_lea.vmem %s4, %s419
        %s421 = smul.u32 16, %s28
        %p422 = scmp.lt.s32.totalorder %s421, 15
        %s423 = scalar_select %p422, %s421, 15
        %s424 = smul.addr %s423, 8
        %s425 = scalar_lea.vmem %s5, %s424
        %s426 = smul.u32 16, %s28
        %p427 = scmp.lt.s32.totalorder %s27, 0
        %s428 = scalar_select %p427, %s27, 0
        %s429 = smul.addr %s428, 2
        %s430 = scalar_lea.vmem %s6, %s429
        %p431 = scmp.eq.s32.totalorder %s28, 0
        // Predicated region
        $region49: #{tpu_custom_call.1} parent=47 // pred_check
          %p432 = pneg %p431
        $region50: #{tpu_custom_call.1} parent=47 // pred_check_branch
          %434 = sbr.rel (%p432) target = $region52
        $region51: #{tpu_custom_call.1} parent=47 // pred_region
          %435 = vst [vmem:[#allocation2] sm:$0xff] 0.0
        $region52: #{tpu_custom_call.1} parent=47 // pred_fallthru
          _
        %v436 = vld [vmem:[%s425] sm:$0xff]
        %v437 = vld [vmem:[%s425 + $0x8] sm:$0xff]
        %v438 = vld [vmem:[%s425 + $0x10] sm:$0xff]
        %v439 = vld [vmem:[%s425 + $0x18] sm:$0xff]
        %v440 = vld [vmem:[%s425 + $0x20] sm:$0xff]
        %v441 = vld [vmem:[%s425 + $0x28] sm:$0xff]
        %v442 = vld [vmem:[%s425 + $0x30] sm:$0xff]
        %v443 = vld [vmem:[%s425 + $0x38] sm:$0xff]
        %v444 = vld [vmem:[%s425 + $0x40] sm:$0xff]
        %v445 = vld [vmem:[%s425 + $0x48] sm:$0xff]
        %v446 = vld [vmem:[%s425 + $0x50] sm:$0xff]
        %v447 = vld [vmem:[%s425 + $0x58] sm:$0xff]
        %v448 = vld [vmem:[%s425 + $0x60] sm:$0xff]
        %v449 = vld [vmem:[%s425 + $0x68] sm:$0xff]
        %v450 = vld [vmem:[%s425 + $0x70] sm:$0xff]
        %v451 = vld [vmem:[%s425 + $0x78] sm:$0xff]
        %v452 = vmul.f32 %v436, 0.5
        %v453 = vmul.f32 %v437, 0.5
        %v454 = vmul.f32 %v438, 0.5
        %v455 = vmul.f32 %v439, 0.5
        %v456 = vmul.f32 %v440, 0.5
        %v457 = vmul.f32 %v441, 0.5
        %v458 = vmul.f32 %v442, 0.5
        %v459 = vmul.f32 %v443, 0.5
        %v460 = vmul.f32 %v444, 0.5
        %v461 = vmul.f32 %v445, 0.5
        %v462 = vmul.f32 %v446, 0.5
        %v463 = vmul.f32 %v447, 0.5
        %v464 = vmul.f32 %v448, 0.5
        %v465 = vmul.f32 %v449, 0.5
        %v466 = vmul.f32 %v450, 0.5
        %v467 = vmul.f32 %v451, 0.5
        %v468 = vld [vmem:[%s430] sm:$0x3]
        %470 = vset.pattern.permute.xlu0 0
        %471 = vperm.xlu0 %470, %v452
        %v472 = vpop.permute.xlu0 %471
        %475 = vset.pattern.permute.xlu0 0
        %476 = vperm.xlu0 %475, %v453
        %v477 = vpop.permute.xlu0 %476
        %480 = vset.pattern.permute.xlu0 0
        %481 = vperm.xlu0 %480, %v454
        %v482 = vpop.permute.xlu0 %481
        %485 = vset.pattern.permute.xlu0 0
        %486 = vperm.xlu0 %485, %v455
        %v487 = vpop.permute.xlu0 %486
        %490 = vset.pattern.permute.xlu0 0
        %491 = vperm.xlu0 %490, %v456
        %v492 = vpop.permute.xlu0 %491
        %495 = vset.pattern.permute.xlu0 0
        %496 = vperm.xlu0 %495, %v457
        %v497 = vpop.permute.xlu0 %496
        %500 = vset.pattern.permute.xlu0 0
        %501 = vperm.xlu0 %500, %v458
        %v502 = vpop.permute.xlu0 %501
        %505 = vset.pattern.permute.xlu0 0
        %506 = vperm.xlu0 %505, %v459
        %v507 = vpop.permute.xlu0 %506
        %510 = vset.pattern.permute.xlu0 0
        %511 = vperm.xlu0 %510, %v460
        %v512 = vpop.permute.xlu0 %511
        %515 = vset.pattern.permute.xlu0 0
        %516 = vperm.xlu0 %515, %v461
        %v517 = vpop.permute.xlu0 %516
        %520 = vset.pattern.permute.xlu0 0
        %521 = vperm.xlu0 %520, %v462
        %v522 = vpop.permute.xlu0 %521
        %525 = vset.pattern.permute.xlu0 0
        %526 = vperm.xlu0 %525, %v463
        %v527 = vpop.permute.xlu0 %526
        %530 = vset.pattern.permute.xlu0 0
        %531 = vperm.xlu0 %530, %v464
        %v532 = vpop.permute.xlu0 %531
        %535 = vset.pattern.permute.xlu0 0
        %536 = vperm.xlu0 %535, %v465
        %v537 = vpop.permute.xlu0 %536
        %540 = vset.pattern.permute.xlu0 0
        %541 = vperm.xlu0 %540, %v466
        %v542 = vpop.permute.xlu0 %541
        %545 = vset.pattern.permute.xlu0 0
        %546 = vperm.xlu0 %545, %v467
        %v547 = vpop.permute.xlu0 %546
        %v549 = vperm.slane %v468, 0
        %v550 = vmul.f32 %v472, %v549
        %v551 = vmul.f32 %v477, %v549
        %v552 = vmul.f32 %v482, %v549
        %v553 = vmul.f32 %v487, %v549
        %v554 = vmul.f32 %v492, %v549
        %v555 = vmul.f32 %v497, %v549
        %v556 = vmul.f32 %v502, %v549
        %v557 = vmul.f32 %v507, %v549
        %v558 = vmul.f32 %v512, %v549
        %v559 = vmul.f32 %v517, %v549
        %v560 = vmul.f32 %v522, %v549
        %v561 = vmul.f32 %v527, %v549
        %v562 = vmul.f32 %v532, %v549
        %v563 = vmul.f32 %v537, %v549
        %v564 = vmul.f32 %v542, %v549
        %v565 = vmul.f32 %v547, %v549
        %566 = vset.pattern.permute.xlu0 1
        %567 = vperm.xlu0 %566, %v452
        %v568 = vpop.permute.xlu0 %567
        %570 = vset.pattern.permute.xlu0 1
        %571 = vperm.xlu0 %570, %v453
        %v572 = vpop.permute.xlu0 %571
        %574 = vset.pattern.permute.xlu0 1
        %575 = vperm.xlu0 %574, %v454
        %v576 = vpop.permute.xlu0 %575
        %578 = vset.pattern.permute.xlu0 1
        %579 = vperm.xlu0 %578, %v455
        %v580 = vpop.permute.xlu0 %579
        %582 = vset.pattern.permute.xlu0 1
        %583 = vperm.xlu0 %582, %v456
        %v584 = vpop.permute.xlu0 %583
        %586 = vset.pattern.permute.xlu0 1
        %587 = vperm.xlu0 %586, %v457
        %v588 = vpop.permute.xlu0 %587
        %590 = vset.pattern.permute.xlu0 1
        %591 = vperm.xlu0 %590, %v458
        %v592 = vpop.permute.xlu0 %591
        %594 = vset.pattern.permute.xlu0 1
        %595 = vperm.xlu0 %594, %v459
        %v596 = vpop.permute.xlu0 %595
        %598 = vset.pattern.permute.xlu0 1
        %599 = vperm.xlu0 %598, %v460
        %v600 = vpop.permute.xlu0 %599
        %602 = vset.pattern.permute.xlu0 1
        %603 = vperm.xlu0 %602, %v461
        %v604 = vpop.permute.xlu0 %603
        %606 = vset.pattern.permute.xlu0 1
        %607 = vperm.xlu0 %606, %v462
        %v608 = vpop.permute.xlu0 %607
        %610 = vset.pattern.permute.xlu0 1
        %611 = vperm.xlu0 %610, %v463
        %v612 = vpop.permute.xlu0 %611
        %614 = vset.pattern.permute.xlu0 1
        %615 = vperm.xlu0 %614, %v464
        %v616 = vpop.permute.xlu0 %615
        %618 = vset.pattern.permute.xlu0 1
        %619 = vperm.xlu0 %618, %v465
        %v620 = vpop.permute.xlu0 %619
        %622 = vset.pattern.permute.xlu0 1
        %623 = vperm.xlu0 %622, %v466
        %v624 = vpop.permute.xlu0 %623
        %626 = vset.pattern.permute.xlu0 1
        %627 = vperm.xlu0 %626, %v467
        %v628 = vpop.permute.xlu0 %627
        %v630 = vperm.slane %v468, 1
        %v631 = vmul.f32 %v568, %v630
        %v632 = vmul.f32 %v572, %v630
        %v633 = vmul.f32 %v576, %v630
        %v634 = vmul.f32 %v580, %v630
        %v635 = vmul.f32 %v584, %v630
        %v636 = vmul.f32 %v588, %v630
        %v637 = vmul.f32 %v592, %v630
        %v638 = vmul.f32 %v596, %v630
        %v639 = vmul.f32 %v600, %v630
        %v640 = vmul.f32 %v604, %v630
        %v641 = vmul.f32 %v608, %v630
        %v642 = vmul.f32 %v612, %v630
        %v643 = vmul.f32 %v616, %v630
        %v644 = vmul.f32 %v620, %v630
        %v645 = vmul.f32 %v624, %v630
        %v646 = vmul.f32 %v628, %v630
        %v647 = vadd.f32 %v550, %v631
        %v648 = vadd.f32 %v551, %v632
        %v649 = vadd.f32 %v552, %v633
        %v650 = vadd.f32 %v553, %v634
        %v651 = vadd.f32 %v554, %v635
        %v652 = vadd.f32 %v555, %v636
        %v653 = vadd.f32 %v556, %v637
        %v654 = vadd.f32 %v557, %v638
        %v655 = vadd.f32 %v558, %v639
        %v656 = vadd.f32 %v559, %v640
        %v657 = vadd.f32 %v560, %v641
        %v658 = vadd.f32 %v561, %v642
        %v659 = vadd.f32 %v562, %v643
        %v660 = vadd.f32 %v563, %v644
        %v661 = vadd.f32 %v564, %v645
        %v662 = vadd.f32 %v565, %v646
        %v663 = vld [vmem:[%s415] sm:$0xff]
        %v664 = vld [vmem:[%s415 + $0x8] sm:$0xff]
        %v665 = vld [vmem:[%s415 + $0x10] sm:$0xff]
        %v666 = vld [vmem:[%s415 + $0x18] sm:$0xff]
        %v667 = vld [vmem:[%s415 + $0x20] sm:$0xff]
        %v668 = vld [vmem:[%s415 + $0x28] sm:$0xff]
        %v669 = vld [vmem:[%s415 + $0x30] sm:$0xff]
        %v670 = vld [vmem:[%s415 + $0x38] sm:$0xff]
        %v671 = vld [vmem:[%s415 + $0x40] sm:$0xff]
        %v672 = vld [vmem:[%s415 + $0x48] sm:$0xff]
        %v673 = vld [vmem:[%s415 + $0x50] sm:$0xff]
        %v674 = vld [vmem:[%s415 + $0x58] sm:$0xff]
        %v675 = vld [vmem:[%s415 + $0x60] sm:$0xff]
        %v676 = vld [vmem:[%s415 + $0x68] sm:$0xff]
        %v677 = vld [vmem:[%s415 + $0x70] sm:$0xff]
        %v678 = vld [vmem:[%s415 + $0x78] sm:$0xff]
        %v679 = vmul.f32 %v663, 0.25
        %v680 = vmul.f32 %v664, 0.25
        %v681 = vmul.f32 %v665, 0.25
        %v682 = vmul.f32 %v666, 0.25
        %v683 = vmul.f32 %v667, 0.25
        %v684 = vmul.f32 %v668, 0.25
        %v685 = vmul.f32 %v669, 0.25
        %v686 = vmul.f32 %v670, 0.25
        %v687 = vmul.f32 %v671, 0.25
        %v688 = vmul.f32 %v672, 0.25
        %v689 = vmul.f32 %v673, 0.25
        %v690 = vmul.f32 %v674, 0.25
        %v691 = vmul.f32 %v675, 0.25
        %v692 = vmul.f32 %v676, 0.25
        %v693 = vmul.f32 %v677, 0.25
        %v694 = vmul.f32 %v678, 0.25
        %v695 = vld [vmem:[%s420] sm:$0xf]
        %697 = vset.pattern.permute.xlu0 0
        %698 = vperm.xlu0 %697, %v679
        %v699 = vpop.permute.xlu0 %698
        %702 = vset.pattern.permute.xlu0 0
        %703 = vperm.xlu0 %702, %v680
        %v704 = vpop.permute.xlu0 %703
        %707 = vset.pattern.permute.xlu0 0
        %708 = vperm.xlu0 %707, %v681
        %v709 = vpop.permute.xlu0 %708
        %712 = vset.pattern.permute.xlu0 0
        %713 = vperm.xlu0 %712, %v682
        %v714 = vpop.permute.xlu0 %713
        %717 = vset.pattern.permute.xlu0 0
        %718 = vperm.xlu0 %717, %v683
        %v719 = vpop.permute.xlu0 %718
        %722 = vset.pattern.permute.xlu0 0
        %723 = vperm.xlu0 %722, %v684
        %v724 = vpop.permute.xlu0 %723
        %727 = vset.pattern.permute.xlu0 0
        %728 = vperm.xlu0 %727, %v685
        %v729 = vpop.permute.xlu0 %728
        %732 = vset.pattern.permute.xlu0 0
        %733 = vperm.xlu0 %732, %v686
        %v734 = vpop.permute.xlu0 %733
        %737 = vset.pattern.permute.xlu0 0
        %738 = vperm.xlu0 %737, %v687
        %v739 = vpop.permute.xlu0 %738
        %742 = vset.pattern.permute.xlu0 0
        %743 = vperm.xlu0 %742, %v688
        %v744 = vpop.permute.xlu0 %743
        %747 = vset.pattern.permute.xlu0 0
        %748 = vperm.xlu0 %747, %v689
        %v749 = vpop.permute.xlu0 %748
        %752 = vset.pattern.permute.xlu0 0
        %753 = vperm.xlu0 %752, %v690
        %v754 = vpop.permute.xlu0 %753
        %757 = vset.pattern.permute.xlu0 0
        %758 = vperm.xlu0 %757, %v691
        %v759 = vpop.permute.xlu0 %758
        %762 = vset.pattern.permute.xlu0 0
        %763 = vperm.xlu0 %762, %v692
        %v764 = vpop.permute.xlu0 %763
        %767 = vset.pattern.permute.xlu0 0
        %768 = vperm.xlu0 %767, %v693
        %v769 = vpop.permute.xlu0 %768
        %772 = vset.pattern.permute.xlu0 0
        %773 = vperm.xlu0 %772, %v694
        %v774 = vpop.permute.xlu0 %773
        %v776 = vperm.slane %v695, 0
        %v777 = vmul.f32 %v699, %v776
        %v778 = vmul.f32 %v704, %v776
        %v779 = vmul.f32 %v709, %v776
        %v780 = vmul.f32 %v714, %v776
        %v781 = vmul.f32 %v719, %v776
        %v782 = vmul.f32 %v724, %v776
        %v783 = vmul.f32 %v729, %v776
        %v784 = vmul.f32 %v734, %v776
        %v785 = vmul.f32 %v739, %v776
        %v786 = vmul.f32 %v744, %v776
        %v787 = vmul.f32 %v749, %v776
        %v788 = vmul.f32 %v754, %v776
        %v789 = vmul.f32 %v759, %v776
        %v790 = vmul.f32 %v764, %v776
        %v791 = vmul.f32 %v769, %v776
        %v792 = vmul.f32 %v774, %v776
        %793 = vset.pattern.permute.xlu0 1
        %794 = vperm.xlu0 %793, %v679
        %v795 = vpop.permute.xlu0 %794
        %797 = vset.pattern.permute.xlu0 1
        %798 = vperm.xlu0 %797, %v680
        %v799 = vpop.permute.xlu0 %798
        %801 = vset.pattern.permute.xlu0 1
        %802 = vperm.xlu0 %801, %v681
        %v803 = vpop.permute.xlu0 %802
        %805 = vset.pattern.permute.xlu0 1
        %806 = vperm.xlu0 %805, %v682
        %v807 = vpop.permute.xlu0 %806
        %809 = vset.pattern.permute.xlu0 1
        %810 = vperm.xlu0 %809, %v683
        %v811 = vpop.permute.xlu0 %810
        %813 = vset.pattern.permute.xlu0 1
        %814 = vperm.xlu0 %813, %v684
        %v815 = vpop.permute.xlu0 %814
        %817 = vset.pattern.permute.xlu0 1
        %818 = vperm.xlu0 %817, %v685
        %v819 = vpop.permute.xlu0 %818
        %821 = vset.pattern.permute.xlu0 1
        %822 = vperm.xlu0 %821, %v686
        %v823 = vpop.permute.xlu0 %822
        %825 = vset.pattern.permute.xlu0 1
        %826 = vperm.xlu0 %825, %v687
        %v827 = vpop.permute.xlu0 %826
        %829 = vset.pattern.permute.xlu0 1
        %830 = vperm.xlu0 %829, %v688
        %v831 = vpop.permute.xlu0 %830
        %833 = vset.pattern.permute.xlu0 1
        %834 = vperm.xlu0 %833, %v689
        %v835 = vpop.permute.xlu0 %834
        %837 = vset.pattern.permute.xlu0 1
        %838 = vperm.xlu0 %837, %v690
        %v839 = vpop.permute.xlu0 %838
        %841 = vset.pattern.permute.xlu0 1
        %842 = vperm.xlu0 %841, %v691
        %v843 = vpop.permute.xlu0 %842
        %845 = vset.pattern.permute.xlu0 1
        %846 = vperm.xlu0 %845, %v692
        %v847 = vpop.permute.xlu0 %846
        %849 = vset.pattern.permute.xlu0 1
        %850 = vperm.xlu0 %849, %v693
        %v851 = vpop.permute.xlu0 %850
        %853 = vset.pattern.permute.xlu0 1
        %854 = vperm.xlu0 %853, %v694
        %v855 = vpop.permute.xlu0 %854
        %v857 = vperm.slane %v695, 1
        %v858 = vmul.f32 %v795, %v857
        %v859 = vmul.f32 %v799, %v857
        %v860 = vmul.f32 %v803, %v857
        %v861 = vmul.f32 %v807, %v857
        %v862 = vmul.f32 %v811, %v857
        %v863 = vmul.f32 %v815, %v857
        %v864 = vmul.f32 %v819, %v857
        %v865 = vmul.f32 %v823, %v857
        %v866 = vmul.f32 %v827, %v857
        %v867 = vmul.f32 %v831, %v857
        %v868 = vmul.f32 %v835, %v857
        %v869 = vmul.f32 %v839, %v857
        %v870 = vmul.f32 %v843, %v857
        %v871 = vmul.f32 %v847, %v857
        %v872 = vmul.f32 %v851, %v857
        %v873 = vmul.f32 %v855, %v857
        %v874 = vadd.f32 %v777, %v858
        %v875 = vadd.f32 %v778, %v859
        %v876 = vadd.f32 %v779, %v860
        %v877 = vadd.f32 %v780, %v861
        %v878 = vadd.f32 %v781, %v862
        %v879 = vadd.f32 %v782, %v863
        %v880 = vadd.f32 %v783, %v864
        %v881 = vadd.f32 %v784, %v865
        %v882 = vadd.f32 %v785, %v866
        %v883 = vadd.f32 %v786, %v867
        %v884 = vadd.f32 %v787, %v868
        %v885 = vadd.f32 %v788, %v869
        %v886 = vadd.f32 %v789, %v870
        %v887 = vadd.f32 %v790, %v871
        %v888 = vadd.f32 %v791, %v872
        %v889 = vadd.f32 %v792, %v873
        %890 = vset.pattern.permute.xlu0 2
        %891 = vperm.xlu0 %890, %v679
        %v892 = vpop.permute.xlu0 %891
        %894 = vset.pattern.permute.xlu0 2
        %895 = vperm.xlu0 %894, %v680
        %v896 = vpop.permute.xlu0 %895
        %898 = vset.pattern.permute.xlu0 2
        %899 = vperm.xlu0 %898, %v681
        %v900 = vpop.permute.xlu0 %899
        %902 = vset.pattern.permute.xlu0 2
        %903 = vperm.xlu0 %902, %v682
        %v904 = vpop.permute.xlu0 %903
        %906 = vset.pattern.permute.xlu0 2
        %907 = vperm.xlu0 %906, %v683
        %v908 = vpop.permute.xlu0 %907
        %910 = vset.pattern.permute.xlu0 2
        %911 = vperm.xlu0 %910, %v684
        %v912 = vpop.permute.xlu0 %911
        %914 = vset.pattern.permute.xlu0 2
        %915 = vperm.xlu0 %914, %v685
        %v916 = vpop.permute.xlu0 %915
        %918 = vset.pattern.permute.xlu0 2
        %919 = vperm.xlu0 %918, %v686
        %v920 = vpop.permute.xlu0 %919
        %922 = vset.pattern.permute.xlu0 2
        %923 = vperm.xlu0 %922, %v687
        %v924 = vpop.permute.xlu0 %923
        %926 = vset.pattern.permute.xlu0 2
        %927 = vperm.xlu0 %926, %v688
        %v928 = vpop.permute.xlu0 %927
        %930 = vset.pattern.permute.xlu0 2
        %931 = vperm.xlu0 %930, %v689
        %v932 = vpop.permute.xlu0 %931
        %934 = vset.pattern.permute.xlu0 2
        %935 = vperm.xlu0 %934, %v690
        %v936 = vpop.permute.xlu0 %935
        %938 = vset.pattern.permute.xlu0 2
        %939 = vperm.xlu0 %938, %v691
        %v940 = vpop.permute.xlu0 %939
        %942 = vset.pattern.permute.xlu0 2
        %943 = vperm.xlu0 %942, %v692
        %v944 = vpop.permute.xlu0 %943
        %946 = vset.pattern.permute.xlu0 2
        %947 = vperm.xlu0 %946, %v693
        %v948 = vpop.permute.xlu0 %947
        %950 = vset.pattern.permute.xlu0 2
        %951 = vperm.xlu0 %950, %v694
        %v952 = vpop.permute.xlu0 %951
        %v954 = vperm.slane %v695, 2
        %v955 = vmul.f32 %v892, %v954
        %v956 = vmul.f32 %v896, %v954
        %v957 = vmul.f32 %v900, %v954
        %v958 = vmul.f32 %v904, %v954
        %v959 = vmul.f32 %v908, %v954
        %v960 = vmul.f32 %v912, %v954
        %v961 = vmul.f32 %v916, %v954
        %v962 = vmul.f32 %v920, %v954
        %v963 = vmul.f32 %v924, %v954
        %v964 = vmul.f32 %v928, %v954
        %v965 = vmul.f32 %v932, %v954
        %v966 = vmul.f32 %v936, %v954
        %v967 = vmul.f32 %v940, %v954
        %v968 = vmul.f32 %v944, %v954
        %v969 = vmul.f32 %v948, %v954
        %v970 = vmul.f32 %v952, %v954
        %v971 = vadd.f32 %v874, %v955
        %v972 = vadd.f32 %v875, %v956
        %v973 = vadd.f32 %v876, %v957
        %v974 = vadd.f32 %v877, %v958
        %v975 = vadd.f32 %v878, %v959
        %v976 = vadd.f32 %v879, %v960
        %v977 = vadd.f32 %v880, %v961
        %v978 = vadd.f32 %v881, %v962
        %v979 = vadd.f32 %v882, %v963
        %v980 = vadd.f32 %v883, %v964
        %v981 = vadd.f32 %v884, %v965
        %v982 = vadd.f32 %v885, %v966
        %v983 = vadd.f32 %v886, %v967
        %v984 = vadd.f32 %v887, %v968
        %v985 = vadd.f32 %v888, %v969
        %v986 = vadd.f32 %v889, %v970
        %987 = vset.pattern.permute.xlu0 3
        %988 = vperm.xlu0 %987, %v679
        %v989 = vpop.permute.xlu0 %988
        %991 = vset.pattern.permute.xlu0 3
        %992 = vperm.xlu0 %991, %v680
        %v993 = vpop.permute.xlu0 %992
        %995 = vset.pattern.permute.xlu0 3
        %996 = vperm.xlu0 %995, %v681
        %v997 = vpop.permute.xlu0 %996
        %999 = vset.pattern.permute.xlu0 3
        %1000 = vperm.xlu0 %999, %v682
        %v1001 = vpop.permute.xlu0 %1000
        %1003 = vset.pattern.permute.xlu0 3
        %1004 = vperm.xlu0 %1003, %v683
        %v1005 = vpop.permute.xlu0 %1004
        %1007 = vset.pattern.permute.xlu0 3
        %1008 = vperm.xlu0 %1007, %v684
        %v1009 = vpop.permute.xlu0 %1008
        %1011 = vset.pattern.permute.xlu0 3
        %1012 = vperm.xlu0 %1011, %v685
        %v1013 = vpop.permute.xlu0 %1012
        %1015 = vset.pattern.permute.xlu0 3
        %1016 = vperm.xlu0 %1015, %v686
        %v1017 = vpop.permute.xlu0 %1016
        %1019 = vset.pattern.permute.xlu0 3
        %1020 = vperm.xlu0 %1019, %v687
        %v1021 = vpop.permute.xlu0 %1020
        %1023 = vset.pattern.permute.xlu0 3
        %1024 = vperm.xlu0 %1023, %v688
        %v1025 = vpop.permute.xlu0 %1024
        %1027 = vset.pattern.permute.xlu0 3
        %1028 = vperm.xlu0 %1027, %v689
        %v1029 = vpop.permute.xlu0 %1028
        %1031 = vset.pattern.permute.xlu0 3
        %1032 = vperm.xlu0 %1031, %v690
        %v1033 = vpop.permute.xlu0 %1032
        %1035 = vset.pattern.permute.xlu0 3
        %1036 = vperm.xlu0 %1035, %v691
        %v1037 = vpop.permute.xlu0 %1036
        %1039 = vset.pattern.permute.xlu0 3
        %1040 = vperm.xlu0 %1039, %v692
        %v1041 = vpop.permute.xlu0 %1040
        %1043 = vset.pattern.permute.xlu0 3
        %1044 = vperm.xlu0 %1043, %v693
        %v1045 = vpop.permute.xlu0 %1044
        %1047 = vset.pattern.permute.xlu0 3
        %1048 = vperm.xlu0 %1047, %v694
        %v1049 = vpop.permute.xlu0 %1048
        %v1051 = vperm.slane %v695, 3
        %v1052 = vmul.f32 %v989, %v1051
        %v1053 = vmul.f32 %v993, %v1051
        %v1054 = vmul.f32 %v997, %v1051
        %v1055 = vmul.f32 %v1001, %v1051
        %v1056 = vmul.f32 %v1005, %v1051
        %v1057 = vmul.f32 %v1009, %v1051
        %v1058 = vmul.f32 %v1013, %v1051
        %v1059 = vmul.f32 %v1017, %v1051
        %v1060 = vmul.f32 %v1021, %v1051
        %v1061 = vmul.f32 %v1025, %v1051
        %v1062 = vmul.f32 %v1029, %v1051
        %v1063 = vmul.f32 %v1033, %v1051
        %v1064 = vmul.f32 %v1037, %v1051
        %v1065 = vmul.f32 %v1041, %v1051
        %v1066 = vmul.f32 %v1045, %v1051
        %v1067 = vmul.f32 %v1049, %v1051
        %v1068 = vadd.f32 %v971, %v1052
        %v1069 = vadd.f32 %v972, %v1053
        %v1070 = vadd.f32 %v973, %v1054
        %v1071 = vadd.f32 %v974, %v1055
        %v1072 = vadd.f32 %v975, %v1056
        %v1073 = vadd.f32 %v976, %v1057
        %v1074 = vadd.f32 %v977, %v1058
        %v1075 = vadd.f32 %v978, %v1059
        %v1076 = vadd.f32 %v979, %v1060
        %v1077 = vadd.f32 %v980, %v1061
        %v1078 = vadd.f32 %v981, %v1062
        %v1079 = vadd.f32 %v982, %v1063
        %v1080 = vadd.f32 %v983, %v1064
        %v1081 = vadd.f32 %v984, %v1065
        %v1082 = vadd.f32 %v985, %v1066
        %v1083 = vadd.f32 %v986, %v1067
        %v1084 = vld [vmem:[%s406] sm:$0xff]
        %v1085 = vld [vmem:[%s406 + $0x8] sm:$0xff]
        %v1086 = vld [vmem:[%s406 + $0x10] sm:$0xff]
        %v1087 = vld [vmem:[%s406 + $0x18] sm:$0xff]
        %v1088 = vld [vmem:[%s406 + $0x20] sm:$0xff]
        %v1089 = vld [vmem:[%s406 + $0x28] sm:$0xff]
        %v1090 = vld [vmem:[%s406 + $0x30] sm:$0xff]
        %v1091 = vld [vmem:[%s406 + $0x38] sm:$0xff]
        %v1092 = vld [vmem:[%s406 + $0x40] sm:$0xff]
        %v1093 = vld [vmem:[%s406 + $0x48] sm:$0xff]
        %v1094 = vld [vmem:[%s406 + $0x50] sm:$0xff]
        %v1095 = vld [vmem:[%s406 + $0x58] sm:$0xff]
        %v1096 = vld [vmem:[%s406 + $0x60] sm:$0xff]
        %v1097 = vld [vmem:[%s406 + $0x68] sm:$0xff]
        %v1098 = vld [vmem:[%s406 + $0x70] sm:$0xff]
        %v1099 = vld [vmem:[%s406 + $0x78] sm:$0xff]
        %v1100 = vmul.f32 %v1084, %v647
        %v1101 = vmul.f32 %v1085, %v648
        %v1102 = vmul.f32 %v1086, %v649
        %v1103 = vmul.f32 %v1087, %v650
        %v1104 = vmul.f32 %v1088, %v651
        %v1105 = vmul.f32 %v1089, %v652
        %v1106 = vmul.f32 %v1090, %v653
        %v1107 = vmul.f32 %v1091, %v654
        %v1108 = vmul.f32 %v1092, %v655
        %v1109 = vmul.f32 %v1093, %v656
        %v1110 = vmul.f32 %v1094, %v657
        %v1111 = vmul.f32 %v1095, %v658
        %v1112 = vmul.f32 %v1096, %v659
        %v1113 = vmul.f32 %v1097, %v660
        %v1114 = vmul.f32 %v1098, %v661
        %v1115 = vmul.f32 %v1099, %v662
        %v1116 = vadd.f32 %v1100, %v1068
        %v1117 = vadd.f32 %v1101, %v1069
        %v1118 = vadd.f32 %v1102, %v1070
        %v1119 = vadd.f32 %v1103, %v1071
        %v1120 = vadd.f32 %v1104, %v1072
        %v1121 = vadd.f32 %v1105, %v1073
        %v1122 = vadd.f32 %v1106, %v1074
        %v1123 = vadd.f32 %v1107, %v1075
        %v1124 = vadd.f32 %v1108, %v1076
        %v1125 = vadd.f32 %v1109, %v1077
        %v1126 = vadd.f32 %v1110, %v1078
        %v1127 = vadd.f32 %v1111, %v1079
        %v1128 = vadd.f32 %v1112, %v1080
        %v1129 = vadd.f32 %v1113, %v1081
        %v1130 = vadd.f32 %v1114, %v1082
        %v1131 = vadd.f32 %v1115, %v1083
        %v1132 = vld [vmem:[#allocation2] sm:$0xff]
        %v1133 = vld [vmem:[%s398] sm:$0xff]
        %1134 = vmatpush.msra.mxu0 %v1131
        %1135 = vmatpush.msra.mxu0 %v1130
        %1136 = vmatpush.msra.mxu0 %v1129
        %1137 = vmatpush.msra.mxu0 %v1128
        %1138 = vmatpush.msra.mxu0 %v1127
        %1139 = vmatpush.msra.mxu0 %v1126
        %1140 = vmatpush.msra.mxu0 %v1125
        %1141 = vmatpush.msra.mxu0 %v1124
        %1142 = vmatpush.msra.mxu0 %v1123
        %1143 = vmatpush.msra.mxu0 %v1122
        %1144 = vmatpush.msra.mxu0 %v1121
        %1145 = vmatpush.msra.mxu0 %v1120
        %1146 = vmatpush.msra.mxu0 %v1119
        %1147 = vmatpush.msra.mxu0 %v1118
        %1148 = vmatpush.msra.mxu0 %v1117
        %1149 = vmatpush.msra.mxu0 %v1116
        %1150 = vmatmul.f32.gmra.mxu0 %v1133
        %v1151 = vpop.f32.mrf.mxu0
        %v1152 = vadd.f32 0.0, %v1151
        %1153 = vdwg.mxu0
        %v1154 = vadd.f32 %v1132, %v1152
        %1155 = vst [vmem:[#allocation2] sm:$0xff] %v1154
        // Predicated region
        $region53: #{tpu_custom_call.1} parent=47 // pred_check
          %p1156 = pneg %p431
        $region54: #{tpu_custom_call.1} parent=47 // pred_check_branch
          %1158 = sbr.rel (%p1156) target = $region56
        $region55: #{tpu_custom_call.1} parent=47 // pred_region
          %v1159 = vld [vmem:[#allocation2] sm:$0xff]
          %v1160 = vld [vmem:[%s410] sm:$0x1]
          %v1162 = vperm.slane %v1160, 0
          %v1164 = vadd.f32 %v1159, %v1162
          %1165 = vst [vmem:[%s391] sm:$0xff] %v1164
        $region56: #{tpu_custom_call.1} parent=47 // pred_fallthru
          _
        %s1166 = sand.u32 %s236, 1
        %s1167 = scalar_lea.sflag [#allocation4], %s1166
        %s1168 = sand.u32 %s236, 1
        %s1169 = smul.addr %s1168, 8
        %s1170 = scalar_lea.vmem [#allocation3], %s1169
        // Predicated region
        $region57: #{tpu_custom_call.1} parent=47 // pred_check
          %p1171 = pneg %p246
        $region58: #{tpu_custom_call.1} parent=47 // pred_check_branch
          %1173 = sbr.rel (%p1171) target = $region60
        $region59: #{tpu_custom_call.1} parent=47 // pred_region
          %1175 = vsyncadd %s1167, 0
          %s1176 = sadd.s32 %s27, %s26
          %s1177 = smul.addr %s1176, 8
          %s1178 = scalar_lea.hbm %s7, %s1177
          %s1180 = sshll.u32 %s1170, 4
          %s1181 = int_to_ptr.vmem [resolvable:$true] %s1180
          %s1182 = sshll.u32 %s1178, 4
          %s1183 = int_to_ptr.hbm [resolvable:$true] %s1182
          %1185 = dma.vmem_to_hbm [thread:$0]  %s1181, 128, %s1183, %s1167
        $region60: #{tpu_custom_call.1} parent=47 // pred_fallthru
          _
      $region48: #{tpu_custom_call.1} parent=5 // pred_fallthru
        _
      %p1186 = scmp.le.s32.totalorder 2, %s16
      // Predicated region
      $region61: #{tpu_custom_call.1} parent=5 // pred_check
        %p1187 = pneg %p1186
      $region62: #{tpu_custom_call.1} parent=5 // pred_check_branch
        %1189 = sbr.rel (%p1187) target = $region64
      $region63: #{tpu_custom_call.1} parent=5 // pred_region
        %s1190 = ssub.s32 %s16, 2
        // Predicated region
        $region65: #{tpu_custom_call.1} parent=63 // pred_check
          %p1191 = pneg %p252
        $region66: #{tpu_custom_call.1} parent=63 // pred_check_branch
          %1193 = sbr.rel (%p1191) target = $region68
        $region67: #{tpu_custom_call.1} parent=63 // pred_region
          %s1194 = sand.u32 %s237, 1
          %s1195 = scalar_lea.sflag [#allocation4], %s1194
          %s1196 = sand.u32 %s237, 1
          %s1197 = smul.addr %s1196, 8
          %s1198 = scalar_lea.vmem [#allocation3], %s1197
          %1200 = dma.done %s1195, 128
        $region68: #{tpu_custom_call.1} parent=63 // pred_fallthru
          _
      $region64: #{tpu_custom_call.1} parent=5 // pred_fallthru
        _
    $region6: #{tpu_custom_call.1} parent=1 // loop_footer
      %s20 = sadd.s32 1, %s16
    $region7: #{tpu_custom_call.1} parent=1 // loop_footer_branch
      %15 = sbr.rel target = $region3
    $region8: #{tpu_custom_call.1} parent=1 // loop_exit
      _
    %1201 = vsyncpa [#allocation4], 1
    %s1202 = scalar_lea.sflag [#allocation4], 1
    %1203 = vsyncpa %s1202, 1

</llo_original>
